<compile_context>
chip_gen: v6e
topology: v6e:2x2x1
jax: 0.10.0
libtpu: 0.0.40
codegen_flags: <defaults>
</compile_context>

<pallas_src>
import functools

import jax
import jax.numpy as jnp
from jax.experimental import pallas as pl
from jax.experimental.pallas import tpu as pltpu


def _round_up(a, b):
    return (a + b - 1) // b * b


def _mc_dropout_kernel(x_ref, w1_ref, b1_ref, w2_ref, b2_ref, bits_ref, o_ref,
                       *, drop_prob, input_dim):
    # x_ref   : [input_dim, TILE_N]   (batch in lanes)
    # w1_ref  : [H, input_dim]
    # b1_ref  : [H, 1]
    # w2_ref  : [2*output_dim, H]
    # b2_ref  : [2*output_dim, 1]
    # bits_ref: [H, TILE_N] uint32
    # o_ref   : [2*output_dim, TILE_N]

    # ---- layer1 ----
    if input_dim == 1:
        # K=1 contraction -> pure VPU broadcast (outer product), no MXU.
        h = w1_ref[...] * x_ref[...] + b1_ref[...]          # [H, TILE_N]
    else:
        h = jnp.dot(w1_ref[...], x_ref[...],
                    preferred_element_type=jnp.float32) + b1_ref[...]

    # ---- ReLU ----
    h = jnp.maximum(h, 0.0)

    # ---- MC dropout (always active, inverted scaling) ----
    if drop_prob >= 1.0:
        # PyTorch F.dropout with p=1 zeroes everything.
        h = jnp.zeros_like(h)
    elif drop_prob > 0.0:
        keep_prob = 1.0 - drop_prob
        thr = min(int(keep_prob * (1 << 32)), (1 << 32) - 1)
        keep = bits_ref[...] < jnp.uint32(thr)               # P(keep) = keep_prob
        h = jnp.where(keep, h * jnp.float32(1.0 / keep_prob), jnp.float32(0.0))

    # ---- layer2 (small dot, lane-dense output) ----
    out = jnp.dot(w2_ref[...], h,
                  preferred_element_type=jnp.float32) + b2_ref[...]
    o_ref[...] = out.astype(o_ref.dtype)


def mc_dropout_forward(x, params, key, drop_prob):
    """MC_Dropout_Model forward pass with one pallas_call.

    x : [*, input_dim]  (flattened to [N, input_dim] like x.view(-1, input_dim))
    params: dict with w1 [D_in, H], b1 [1, H], w2 [H, 2*D_out], b2 [1, 2*D_out]
    key: jax PRNG key for the dropout mask.
    Returns [N, 2*D_out] float32.
    """
    w1, b1, w2, b2 = params["w1"], params["b1"], params["w2"], params["b2"]
    input_dim, hidden = w1.shape
    out_dim2 = w2.shape[1]

    x2 = x.reshape(-1, input_dim).astype(jnp.float32)
    n = x2.shape[0]

    # Row tile (in lanes). Multiple of 128 for lane-dense stores; capped so the
    # per-tile double-buffered footprint stays far below v7x's 64 MiB VMEM.
    tile_n = min(2048, _round_up(max(n, 1), 128))
    n_pad = _round_up(n, tile_n)
    grid = (n_pad // tile_n,)

    # Batch-in-lanes layouts.
    xt = jnp.pad(x2.T, ((0, 0), (0, n_pad - n)))             # [input_dim, n_pad]
    w1t = w1.T                                                # [H, input_dim]
    b1t = b1.reshape(1, hidden).T                             # [H, 1]
    w2t = w2.T                                                # [out_dim2, H]
    b2t = b2.reshape(1, out_dim2).T                           # [out_dim2, 1]

    # Host-side dropout bits; tiled alongside x so every tile gets an
    # independent stream (no correlated masks across tiles).
    bits = jax.random.bits(key, (hidden, n_pad), dtype=jnp.uint32)

    kernel = functools.partial(
        _mc_dropout_kernel, drop_prob=float(drop_prob), input_dim=int(input_dim))

    resident = lambda i: (0, 0)          # weights/biases stay in VMEM
    col_tile = lambda i: (0, i)          # batch tiles march along lanes

    out_t = pl.pallas_call(
        kernel,
        out_shape=jax.ShapeDtypeStruct((out_dim2, n_pad), jnp.float32),
        grid=grid,
        in_specs=[
            pl.BlockSpec((input_dim, tile_n), col_tile),      # x
            pl.BlockSpec((hidden, input_dim), resident),      # w1^T
            pl.BlockSpec((hidden, 1), resident),              # b1^T
            pl.BlockSpec((out_dim2, hidden), resident),       # w2^T
            pl.BlockSpec((out_dim2, 1), resident),            # b2^T
            pl.BlockSpec((hidden, tile_n), col_tile),         # dropout bits
        ],
        out_specs=pl.BlockSpec((out_dim2, tile_n), col_tile),
        compiler_params=pltpu.CompilerParams(
            dimension_semantics=("parallel",)),
    )(xt, w1t, b1t, w2t, b2t, bits)

    return out_t[:, :n].T                                     # [N, out_dim2]


def init_params(key, input_dim, output_dim, num_units):
    """Deterministic init mimicking nn.Linear (uniform +/- 1/sqrt(fan_in))."""
    k1, k2, k3, k4 = jax.random.split(key, 4)
    bnd1 = 1.0 / (input_dim ** 0.5)
    bnd2 = 1.0 / (num_units ** 0.5)
    w1 = jax.random.uniform(k1, (input_dim, num_units), jnp.float32, -bnd1, bnd1)
    b1 = jax.random.uniform(k2, (1, num_units), jnp.float32, -bnd1, bnd1)
    w2 = jax.random.uniform(k3, (num_units, 2 * output_dim), jnp.float32, -bnd2, bnd2)
    b2 = jax.random.uniform(k4, (1, 2 * output_dim), jnp.float32, -bnd2, bnd2)
    return {"w1": w1, "b1": b1, "w2": w2, "b2": b2}


if __name__ == "__main__":
    # Module config implied by the reference script: input_dim=1, output_dim=1.
    input_dim = 1
    output_dim = 1
    num_units = 32
    drop_prob = 0.5
    batch = 16

    key = jax.random.PRNGKey(0)
    k_x, k_p, k_drop = jax.random.split(key, 3)

    # x ~ Uniform(-3, 3), shape [batch, 1] like np.random.uniform(...)[:, None]
    x = jax.random.uniform(k_x, (batch, input_dim), jnp.float32, -3.0, 3.0)
    params = init_params(k_p, input_dim, output_dim, num_units)

    out = mc_dropout_forward(x, params, key=k_drop, drop_prob=drop_prob)
    out = jax.block_until_ready(out)

    assert out.shape == (batch, 2 * output_dim)
    assert out.dtype == jnp.float32
    assert bool(jnp.all(jnp.isfinite(out)))
    print("KERNEL_OK")
</pallas_src>

<mosaic_0001>
module attributes {stable_mosaic.version = 11 : i64} {
  func.func @_mc_dropout_kernel(%arg0: i32, %arg1: memref<1x128xf32, #tpu.memory_space<vmem>>, %arg2: memref<32x1xf32, #tpu.memory_space<vmem>>, %arg3: memref<32x1xf32, #tpu.memory_space<vmem>>, %arg4: memref<2x32xf32, #tpu.memory_space<vmem>>, %arg5: memref<2x1xf32, #tpu.memory_space<vmem>>, %arg6: memref<32x128xi32, #tpu.memory_space<vmem>>, %arg7: memref<2x128xf32, #tpu.memory_space<vmem>>) attributes {dimension_semantics = [#tpu.dimension_semantics<parallel>], iteration_bounds = array<i64: 1>, scalar_prefetch = 0 : i64, scratch_operands = 0 : i64, tpu.core_type = #tpu.core_type<tc>, window_params = [{transform_indices = @transform_0, window_bounds = array<i64: 1, 128>}, {pipeline_mode = #tpu.pipeline_mode<synchronous>, transform_indices = @transform_1, window_bounds = array<i64: 32, 1>}, {pipeline_mode = #tpu.pipeline_mode<synchronous>, transform_indices = @transform_2, window_bounds = array<i64: 32, 1>}, {pipeline_mode = #tpu.pipeline_mode<synchronous>, transform_indices = @transform_3, window_bounds = array<i64: 2, 32>}, {pipeline_mode = #tpu.pipeline_mode<synchronous>, transform_indices = @transform_4, window_bounds = array<i64: 2, 1>}, {transform_indices = @transform_5, window_bounds = array<i64: 32, 128>}, {transform_indices = @transform_6, window_bounds = array<i64: 2, 128>}]} {
    %c0 = arith.constant 0 : index
    %c0_0 = arith.constant 0 : index
    %0 = vector.load %arg2[%c0, %c0_0] : memref<32x1xf32, #tpu.memory_space<vmem>>, vector<32x1xf32>
    %c0_1 = arith.constant 0 : index
    %c0_2 = arith.constant 0 : index
    %1 = vector.load %arg1[%c0_1, %c0_2] : memref<1x128xf32, #tpu.memory_space<vmem>>, vector<1x128xf32>
    %2 = vector.broadcast %0 : vector<32x1xf32> to vector<32x128xf32>
    %3 = vector.broadcast %1 : vector<1x128xf32> to vector<32x128xf32>
    %4 = arith.mulf %2, %3 : vector<32x128xf32>
    %c0_3 = arith.constant 0 : index
    %c0_4 = arith.constant 0 : index
    %5 = vector.load %arg3[%c0_3, %c0_4] : memref<32x1xf32, #tpu.memory_space<vmem>>, vector<32x1xf32>
    %6 = vector.broadcast %5 : vector<32x1xf32> to vector<32x128xf32>
    %7 = arith.addf %4, %6 : vector<32x128xf32>
    %cst = arith.constant 0.000000e+00 : f32
    %8 = vector.broadcast %cst : f32 to vector<32x128xf32>
    %9 = arith.maximumf %7, %8 : vector<32x128xf32>
    %c0_5 = arith.constant 0 : index
    %c0_6 = arith.constant 0 : index
    %10 = vector.load %arg6[%c0_5, %c0_6] : memref<32x128xi32, #tpu.memory_space<vmem>>, vector<32x128xi32>
    %c-2147483648_i32 = arith.constant -2147483648 : i32
    %11 = vector.broadcast %c-2147483648_i32 : i32 to vector<32x128xi32>
    %12 = arith.cmpi ult, %10, %11 : vector<32x128xi32>
    %cst_7 = arith.constant 2.000000e+00 : f32
    %13 = vector.broadcast %cst_7 : f32 to vector<32x128xf32>
    %14 = arith.mulf %9, %13 : vector<32x128xf32>
    %cst_8 = arith.constant 0.000000e+00 : f32
    %15 = vector.broadcast %cst_8 : f32 to vector<32x128xf32>
    %16 = arith.select %12, %14, %15 : vector<32x128xi1>, vector<32x128xf32>
    %c0_9 = arith.constant 0 : index
    %c0_10 = arith.constant 0 : index
    %17 = vector.load %arg4[%c0_9, %c0_10] : memref<2x32xf32, #tpu.memory_space<vmem>>, vector<2x32xf32>
    %cst_11 = arith.constant dense<0.000000e+00> : vector<2x128xf32>
    %18 = tpu.matmul %17, %16, %cst_11 {dimension_numbers = #tpu.dot_dimension_numbers<[1], [0], [0], [1], [0, 0, 1, 1], [], []>} : vector<2x32xf32>, vector<32x128xf32>, vector<2x128xf32> -> vector<2x128xf32>
    %c0_12 = arith.constant 0 : index
    %c0_13 = arith.constant 0 : index
    %19 = vector.load %arg5[%c0_12, %c0_13] : memref<2x1xf32, #tpu.memory_space<vmem>>, vector<2x1xf32>
    %20 = vector.broadcast %19 : vector<2x1xf32> to vector<2x128xf32>
    %21 = arith.addf %18, %20 : vector<2x128xf32>
    %c0_14 = arith.constant 0 : index
    %c0_15 = arith.constant 0 : index
    %22 = vector.load %arg7[%c0_14, %c0_15] : memref<2x128xf32, #tpu.memory_space<vmem>>, vector<2x128xf32>
    tpu.vector_store %arg7[%c0_14, %c0_15], %21 {strides = array<i32>} : memref<2x128xf32, #tpu.memory_space<vmem>>, vector<2x128xf32>,
    return
  }
  func.func @transform_0(%arg0: i32) -> (i32, i32) {
    %c0_i32 = arith.constant 0 : i32
    %c0_i32_0 = arith.constant 0 : i32
    return %c0_i32, %arg0 : i32, i32
  }
  func.func @transform_1(%arg0: i32) -> (i32, i32) {
    %c0_i32 = arith.constant 0 : i32
    %c0_i32_0 = arith.constant 0 : i32
    %c0_i32_1 = arith.constant 0 : i32
    return %c0_i32, %c0_i32_0 : i32, i32
  }
  func.func @transform_2(%arg0: i32) -> (i32, i32) {
    %c0_i32 = arith.constant 0 : i32
    %c0_i32_0 = arith.constant 0 : i32
    %c0_i32_1 = arith.constant 0 : i32
    return %c0_i32, %c0_i32_0 : i32, i32
  }
  func.func @transform_3(%arg0: i32) -> (i32, i32) {
    %c0_i32 = arith.constant 0 : i32
    %c0_i32_0 = arith.constant 0 : i32
    %c0_i32_1 = arith.constant 0 : i32
    return %c0_i32, %c0_i32_0 : i32, i32
  }
  func.func @transform_4(%arg0: i32) -> (i32, i32) {
    %c0_i32 = arith.constant 0 : i32
    %c0_i32_0 = arith.constant 0 : i32
    %c0_i32_1 = arith.constant 0 : i32
    return %c0_i32, %c0_i32_0 : i32, i32
  }
  func.func @transform_5(%arg0: i32) -> (i32, i32) {
    %c0_i32 = arith.constant 0 : i32
    %c0_i32_0 = arith.constant 0 : i32
    return %c0_i32, %arg0 : i32, i32
  }
  func.func @transform_6(%arg0: i32) -> (i32, i32) {
    %c0_i32 = arith.constant 0 : i32
    %c0_i32_0 = arith.constant 0 : i32
    return %c0_i32, %arg0 : i32, i32
  }
}

</mosaic_0001>

<llo_original>
// kernel: tpu_custom_call.1
$region0: #{tpu_custom_call.1}
  #allocation0 [shape = 'u32[]', space=smem, size = 0x4, offset = 0x4, fixed_abs, tag = 'smem constant byte address 0x4 - core index']
  #allocation1 [shape = 'u32[144,128]{1,0:T(1,128)}', space=vmem, size = 0x12000, scoped, tag = 'internal scratch']
  %s0 = inlined_call_operand.vmem [shape: f32[1,128], index: 0, kind: input, shape index: {}]
  %s1 = inlined_call_operand.vmem [shape: f32[32,1], index: 1, kind: input, shape index: {}]
  %s2 = inlined_call_operand.vmem [shape: f32[32,1], index: 2, kind: input, shape index: {}]
  %s3 = inlined_call_operand.vmem [shape: f32[2,32], index: 3, kind: input, shape index: {}]
  %s4 = inlined_call_operand.vmem [shape: f32[2,1], index: 4, kind: input, shape index: {}]
  %s5 = inlined_call_operand.vmem [shape: u32[32,128], index: 5, kind: input, shape index: {}]
  %s6 = inlined_call_operand.hbm [shape: f32[2,128], index: 6, kind: output, shape index: {}]
  %s7 = sld [smem:[#allocation0]]
  $region34: #{tpu_custom_call.1} parent=0
    _
  %s9 = ssub.s32 1, %s7
  %s10 = scalar_select 0, %s9, %s7
  $region1: #{tpu_custom_call.1} parent=0
    #allocation2 [shape = 'u8[1024]{0}', space=vmem, size = 0x400, scoped, tag = 'output window, operand 0, single buffered']
    #allocation3 [shape = 's32[1]{0}', space=sflag, size = 0x4, scoped, tag = 'scoped memory for tpu_custom_call.1']
    %11 = vsyncpa [#allocation3], 0
    // Predicated region
    $region2: #{tpu_custom_call.1} parent=1 // pred_check
      _
    $region3: #{tpu_custom_call.1} parent=1 // pred_check_branch
      %13 = sbr.rel (0) target = $region5
    $region4: #{tpu_custom_call.1} parent=1 // pred_region
      _
    $region5: #{tpu_custom_call.1} parent=1 // pred_fallthru
      _
    // Predicated region
    $region6: #{tpu_custom_call.1} parent=1 // pred_check
      _
    $region7: #{tpu_custom_call.1} parent=1 // pred_check_branch
      %15 = sbr.rel (0) target = $region9
    $region8: #{tpu_custom_call.1} parent=1 // pred_region
      _
    $region9: #{tpu_custom_call.1} parent=1 // pred_fallthru
      _
    // Predicated region
    $region10: #{tpu_custom_call.1} parent=1 // pred_check
      _
    $region11: #{tpu_custom_call.1} parent=1 // pred_check_branch
      %17 = sbr.rel (0) target = $region13
    $region12: #{tpu_custom_call.1} parent=1 // pred_region
      _
    $region13: #{tpu_custom_call.1} parent=1 // pred_fallthru
      _
    // Predicated region
    $region14: #{tpu_custom_call.1} parent=1 // pred_check
      _
    $region15: #{tpu_custom_call.1} parent=1 // pred_check_branch
      %19 = sbr.rel (0) target = $region17
    $region16: #{tpu_custom_call.1} parent=1 // pred_region
      _
    $region17: #{tpu_custom_call.1} parent=1 // pred_fallthru
      _
    // Predicated region
    $region18: #{tpu_custom_call.1} parent=1 // pred_check
      _
    $region19: #{tpu_custom_call.1} parent=1 // pred_check_branch
      %21 = sbr.rel (0) target = $region21
    $region20: #{tpu_custom_call.1} parent=1 // pred_region
      _
    $region21: #{tpu_custom_call.1} parent=1 // pred_fallthru
      _
    // Predicated region
    $region22: #{tpu_custom_call.1} parent=1 // pred_check
      _
    $region23: #{tpu_custom_call.1} parent=1 // pred_check_branch
      %23 = sbr.rel (0) target = $region25
    $region24: #{tpu_custom_call.1} parent=1 // pred_region
      _
    $region25: #{tpu_custom_call.1} parent=1 // pred_fallthru
      _
    %v24 = vld [vmem:[%s1] sm:$0xff]
    %v25 = vld [vmem:[%s1 + $0x8] sm:$0xff]
    %v26 = vld [vmem:[%s1 + $0x10] sm:$0xff]
    %v27 = vld [vmem:[%s1 + $0x18] sm:$0xff]
    %v28 = vld [vmem:[%s0] sm:$0x1]
    %30 = vset.pattern.permute.xlu0 0
    %31 = vperm.xlu0 %30, %v24
    %v32 = vpop.permute.xlu0 %31
    %35 = vset.pattern.permute.xlu0 0
    %36 = vperm.xlu0 %35, %v25
    %v37 = vpop.permute.xlu0 %36
    %40 = vset.pattern.permute.xlu0 0
    %41 = vperm.xlu0 %40, %v26
    %v42 = vpop.permute.xlu0 %41
    %45 = vset.pattern.permute.xlu0 0
    %46 = vperm.xlu0 %45, %v27
    %v47 = vpop.permute.xlu0 %46
    %v50 = vlaneseq
    %v51 = vshrl.u32 %v50, 7
    %v52 = vsub.s32 0, %v51
    %v53 = vrot.slane %v28, %v52
    %v55 = vmul.f32 %v32, %v53
    %v56 = vmul.f32 %v37, %v53
    %v57 = vmul.f32 %v42, %v53
    %v58 = vmul.f32 %v47, %v53
    %v59 = vld [vmem:[%s2] sm:$0xff]
    %v60 = vld [vmem:[%s2 + $0x8] sm:$0xff]
    %v61 = vld [vmem:[%s2 + $0x10] sm:$0xff]
    %v62 = vld [vmem:[%s2 + $0x18] sm:$0xff]
    %64 = vset.pattern.permute.xlu0 0
    %65 = vperm.xlu0 %64, %v59
    %v66 = vpop.permute.xlu0 %65
    %69 = vset.pattern.permute.xlu0 0
    %70 = vperm.xlu0 %69, %v60
    %v71 = vpop.permute.xlu0 %70
    %74 = vset.pattern.permute.xlu0 0
    %75 = vperm.xlu0 %74, %v61
    %v76 = vpop.permute.xlu0 %75
    %79 = vset.pattern.permute.xlu0 0
    %80 = vperm.xlu0 %79, %v62
    %v81 = vpop.permute.xlu0 %80
    %v83 = vadd.f32 %v55, %v66
    %v84 = vadd.f32 %v56, %v71
    %v85 = vadd.f32 %v57, %v76
    %v86 = vadd.f32 %v58, %v81
    %v87 = vmax.f32 %v83, 0.0
    %v88 = vmax.f32 %v84, 0.0
    %v89 = vmax.f32 %v85, 0.0
    %v90 = vmax.f32 %v86, 0.0
    %v91 = vld [vmem:[%s5] sm:$0xff]
    %v92 = vld [vmem:[%s5 + $0x8] sm:$0xff]
    %v93 = vld [vmem:[%s5 + $0x10] sm:$0xff]
    %v94 = vld [vmem:[%s5 + $0x18] sm:$0xff]
    %vm95 = vcmp.lt.u32.totalorder %v91, 2147483648
    %vm96 = vcmp.lt.u32.totalorder %v92, 2147483648
    %vm97 = vcmp.lt.u32.totalorder %v93, 2147483648
    %vm98 = vcmp.lt.u32.totalorder %v94, 2147483648
    %v99 = vmul.f32 %v87, 2.0
    %v100 = vmul.f32 %v88, 2.0
    %v101 = vmul.f32 %v89, 2.0
    %v102 = vmul.f32 %v90, 2.0
    %v103 = vsel %vm95, %v99, 0.0
    %v104 = vsel %vm96, %v100, 0.0
    %v105 = vsel %vm97, %v101, 0.0
    %v106 = vsel %vm98, %v102, 0.0
    %v107 = vld [vmem:[%s3] sm:$0x3]
    %v108 = vld [vmem:[%s4] sm:$0x3]
    %110 = vset.pattern.permute.xlu0 0
    %111 = vperm.xlu0 %110, %v108
    %v112 = vpop.permute.xlu0 %111
    %vm114 = vcmask 261120
    %v116 = vsel %vm114, %v107, 0
    %118 = vmatprep.subr.mxu0 0.0
    %119 = vmatpush1.msra.mxu0 0.0
    %120 = vmatprep.subr.mxu0 0.0
    %121 = vmatpush1.msra.mxu0 0.0
    %122 = vmatprep.subr.mxu0 0.0
    %123 = vmatpush1.msra.mxu0 0.0
    %124 = vmatprep.subr.mxu0 0.0
    %125 = vmatpush1.msra.mxu0 0.0
    %126 = vmatprep.subr.mxu0 0.0
    %127 = vmatpush1.msra.mxu0 0.0
    %128 = vmatprep.subr.mxu0 0.0
    %129 = vmatpush1.msra.mxu0 0.0
    %130 = vmatprep.subr.mxu0 0.0
    %131 = vmatpush1.msra.mxu0 0.0
    %132 = vmatprep.subr.mxu0 0.0
    %133 = vmatpush1.msra.mxu0 0.0
    %134 = vmatprep.subr.mxu0 0.0
    %135 = vmatpush1.msra.mxu0 0.0
    %136 = vmatprep.subr.mxu0 0.0
    %137 = vmatpush1.msra.mxu0 0.0
    %138 = vmatprep.subr.mxu0 0.0
    %139 = vmatpush1.msra.mxu0 0.0
    %140 = vmatprep.subr.mxu0 0.0
    %141 = vmatpush1.msra.mxu0 0.0
    %142 = vmatprep.subr.mxu0 0.0
    %143 = vmatpush1.msra.mxu0 %v106
    %144 = vmatprep.subr.mxu0 0.0
    %145 = vmatpush1.msra.mxu0 %v105
    %146 = vmatprep.subr.mxu0 0.0
    %147 = vmatpush1.msra.mxu0 %v104
    %148 = vmatprep.subr.mxu0 0.0
    %149 = vmatpush1.msra.mxu0 %v103
    %150 = vmatprep.subr.mxu0 0.0
    %151 = vmatpush2.msra.mxu0 0.0
    %152 = vmatprep.subr.mxu0 0.0
    %153 = vmatpush2.msra.mxu0 0.0
    %154 = vmatprep.subr.mxu0 0.0
    %155 = vmatpush2.msra.mxu0 0.0
    %156 = vmatprep.subr.mxu0 0.0
    %157 = vmatpush2.msra.mxu0 0.0
    %158 = vmatprep.subr.mxu0 0.0
    %159 = vmatpush2.msra.mxu0 0.0
    %160 = vmatprep.subr.mxu0 0.0
    %161 = vmatpush2.msra.mxu0 0.0
    %162 = vmatprep.subr.mxu0 0.0
    %163 = vmatpush2.msra.mxu0 0.0
    %164 = vmatprep.subr.mxu0 0.0
    %165 = vmatpush2.msra.mxu0 0.0
    %166 = vmatprep.subr.mxu0 0.0
    %167 = vmatpush2.msra.mxu0 0.0
    %168 = vmatprep.subr.mxu0 0.0
    %169 = vmatpush2.msra.mxu0 0.0
    %170 = vmatprep.subr.mxu0 0.0
    %171 = vmatpush2.msra.mxu0 0.0
    %172 = vmatprep.subr.mxu0 0.0
    %173 = vmatpush2.msra.mxu0 0.0
    %174 = vmatprep.subr.mxu0 0.0
    %175 = vmatpush2.msra.mxu0 0.0
    %176 = vmatprep.subr.mxu0 0.0
    %177 = vmatpush2.msra.mxu0 0.0
    %178 = vmatprep.subr.mxu0 0.0
    %179 = vmatpush2.msra.mxu0 0.0
    %180 = vmatprep.subr.mxu0 0.0
    %181 = vmatpush2.msra.mxu0 0.0
    %182 = vmatprep.mubr.f32.mxu0 0.0
    %183 = vmatmul.mubr.f32.gmra.mxu0 %v116
    %v184 = vpop.f32.mrf.mxu0
    %v185 = vadd.f32 %v112, %v184
    %v186 = vpop.f32.mrf.mxu0
    %187 = vdwg.mxu0
    %188 = vst [vmem:[#allocation2] sm:$0x3] %v185
    // Predicated region
    $region26: #{tpu_custom_call.1} parent=1 // pred_check
      _
    $region27: #{tpu_custom_call.1} parent=1 // pred_check_branch
      %190 = sbr.rel (0) target = $region29
    $region28: #{tpu_custom_call.1} parent=1 // pred_region
      %s192 = ssub.s32 32, 32
      %193 = vsyncadd [#allocation3], %s192
      %s195 = sshll.u32 [#allocation2], 4
      %s196 = int_to_ptr.vmem [resolvable:$true] %s195
      %198 = dma.vmem_to_hbm [thread:$0]  %s196, 32, %s6, [#allocation3]
    $region29: #{tpu_custom_call.1} parent=1 // pred_fallthru
      _
    // Predicated region
    $region30: #{tpu_custom_call.1} parent=1 // pred_check
      _
    $region31: #{tpu_custom_call.1} parent=1 // pred_check_branch
      %200 = sbr.rel (0) target = $region33
    $region32: #{tpu_custom_call.1} parent=1 // pred_region
      %201 = dma.done [#allocation3], 32
    $region33: #{tpu_custom_call.1} parent=1 // pred_fallthru
      _
    %202 = vsyncpa [#allocation3], 1

</llo_original>
